<compile_context>
chip_gen: v5e
topology: v5e:2x2
jax: 0.10.0
libtpu: 0.0.40
codegen_flags: <defaults>
</compile_context>

<pallas_src>
import jax
import jax.numpy as jnp
from jax import lax
from jax.experimental import pallas as pl
from jax.experimental.pallas import tpu as pltpu

KERNEL_SIZE = 5
PADDING = 2
LEAKY_SLOPE = 0.01   # nn.LeakyReLU() default
BN_EPS = 1e-5        # nn.BatchNorm2d default
LANE = 128


def _round_up(x, m):
    return ((x + m - 1) // m) * m


def _pick_batch_tile(n):
    # Fold batch into the matmul M (amortize per-step overhead) while keeping at least
    # 2 grid steps so v7x's second TensorCore gets work when n >= 2.
    best = 1
    for bt in range(1, n // 2 + 1):
        if n % bt == 0:
            best = bt
    return best if n >= 2 else 1


def _build_toeplitz_weights(w_scaled_oihw, width, npad):
    """Toeplitz-expanded conv weights for the row-matmul formulation.

    Returns (K, Wpad*Cin, Npad) with
      wt[kh, jj*Cin + c, dj*(Wp*Cout) + jp*Cout + co] = W[co, c, kh, jj - (2*jp + dj)]
    (zero where the kw tap falls outside [0, K)).  BN scale is already folded into W.
    """
    cout, cin, k, _ = w_scaled_oihw.shape
    wpad = width + 2 * PADDING
    wp = width // 2
    wpco = wp * cout
    w_k = jnp.transpose(w_scaled_oihw, (2, 3, 1, 0))            # (kh, kw, cin, cout)
    jj = jnp.arange(wpad)[:, None, None]                        # (wpad, 1, 1)
    dj = jnp.arange(2)[None, :, None]                           # (1, 2, 1)
    jp = jnp.arange(wp)[None, None, :]                          # (1, 1, wp)
    kw = jj - (2 * jp + dj)                                     # (wpad, 2, wp)
    valid = (kw >= 0) & (kw < k)
    kw_c = jnp.clip(kw, 0, k - 1)
    g = w_k[:, kw_c, :, :]                                      # (k, wpad, 2, wp, cin, cout)
    g = jnp.where(valid[None, :, :, :, None, None], g, 0.0)
    g = jnp.transpose(g, (0, 1, 4, 2, 3, 5))                    # (k, jj, cin, dj, jp, cout)
    wt = g.reshape(k, wpad * cin, 2 * wpco)
    wt = jnp.pad(wt, ((0, 0), (0, 0), (0, npad - 2 * wpco)))
    return wt.astype(jnp.bfloat16)


def _conv_block_kernel(x_ref, wt_ref, shift_ref, o_ref):
    # x_ref:     (bt, Hpad, Wpad*Cin)  bf16 padded input rows ((W, C) flattened)
    # wt_ref:    (K, Wpad*Cin, Npad)   bf16 Toeplitz weights (BN scale folded in)
    # shift_ref: (1, Wp*Cout)          f32 folded conv-bias + BN shift
    # o_ref:     (bt, Hp, Wp*Cout)     bf16 pooled activations (dense NHWC rows)
    bt, hpad, _ = x_ref.shape
    k = wt_ref.shape[0]
    npad = wt_ref.shape[2]
    h = hpad - (k - 1)
    hp = h // 2
    wpco = o_ref.shape[2]

    def lhs(kh):
        parts = [x_ref[b, kh:kh + h, :] for b in range(bt)]     # static row-shifted slices
        return parts[0] if bt == 1 else jnp.concatenate(parts, axis=0)

    # Conv as 5 row-tap MXU matmuls accumulated in f32 (no im2col, no lane gathers).
    z = jnp.dot(lhs(0), wt_ref[0], preferred_element_type=jnp.float32)
    for kh in range(1, k):
        z = z + jnp.dot(lhs(kh), wt_ref[kh], preferred_element_type=jnp.float32)
    # z: (bt*h, npad); columns laid out as (dj, jp, co), zero-padded to npad.

    # MaxPool2d(2, stride=2): adjacent-row max, then max of the two dj column halves.
    zp = z.reshape(bt * hp, 2, npad)
    zr = jnp.maximum(zp[:, 0, :], zp[:, 1, :])
    zc = jnp.maximum(zr[:, :wpco], zr[:, wpco:2 * wpco])

    # Folded conv-bias + BN shift, then LeakyReLU (both commute exactly with the max:
    # the shift is per-output-channel and LeakyReLU is monotone).  f32 on the VPU.
    zc = zc + shift_ref[...]
    zc = jnp.where(zc >= 0, zc, LEAKY_SLOPE * zc)
    o_ref[...] = zc.reshape(bt, hp, wpco).astype(o_ref.dtype)


def conv_block(x_nhwc, w_oihw, bias, gamma, beta, mean, var):
    n, h, w, cin = x_nhwc.shape
    assert h % 2 == 0 and w % 2 == 0, "2x2/stride-2 pooling fold assumes even H, W"
    cout = w_oihw.shape[0]
    hp, wp = h // 2, w // 2
    hpad = h + 2 * PADDING
    wpadc = (w + 2 * PADDING) * cin
    wpco = wp * cout
    npad = _round_up(2 * wpco, LANE)

    scale = gamma / jnp.sqrt(var + BN_EPS)
    shift = (bias - mean) * scale + beta

    # BN scale folded into the conv weights in f32, then Toeplitz-expanded, then bf16.
    wt = _build_toeplitz_weights(w_oihw * scale[:, None, None, None], w, npad)
    shift_row = jnp.tile(shift, (wp,)).reshape(1, wpco).astype(jnp.float32)

    # Padded input at ~1x bytes (bf16), rows flattened as (W+4)*Cin for contiguous DMA.
    xp = jnp.pad(x_nhwc, ((0, 0), (PADDING, PADDING), (PADDING, PADDING), (0, 0)))
    xp = xp.astype(jnp.bfloat16).reshape(n, hpad, wpadc)

    bt = _pick_batch_tile(n)

    # VMEM guard (double-buffered blocks, lane/sublane padding approximated).
    vmem_est = 2 * (bt * hpad * max(wpadc, LANE) * 2
                    + KERNEL_SIZE * wpadc * npad * 2
                    + max(wpco, LANE) * 4
                    + bt * hp * max(wpco, LANE) * 2)
    # TODO(synk): tile over output rows (4-row halo) if this ever trips for large H/W/C.
    assert vmem_est < 24 * 1024 * 1024, vmem_est

    out = pl.pallas_call(
        _conv_block_kernel,
        out_shape=jax.ShapeDtypeStruct((n, hp, wpco), jnp.bfloat16),
        grid_spec=pltpu.PrefetchScalarGridSpec(
            num_scalar_prefetch=0,
            grid=(n // bt,),
            in_specs=[
                pl.BlockSpec((bt, hpad, wpadc), lambda b: (b, 0, 0)),
                pl.BlockSpec((KERNEL_SIZE, wpadc, npad), lambda b: (0, 0, 0)),
                pl.BlockSpec((1, wpco), lambda b: (0, 0)),
            ],
            out_specs=pl.BlockSpec((bt, hp, wpco), lambda b: (b, 0, 0)),
        ),
        compiler_params=pltpu.CompilerParams(
            dimension_semantics=("parallel",),
            vmem_limit_bytes=64 * 1024 * 1024,
        ),
    )(xp, wt, shift_row)

    return out.reshape(n, hp, wp, cout)   # dense bf16 NHWC pooled activations


def init_params(key, model_size):
    params = []
    for i in range(len(model_size) - 1):
        cin, cout = model_size[i], model_size[i + 1]
        key, kw, kb, kg, kbe, km, kv = jax.random.split(key, 7)
        fan_in = cin * KERNEL_SIZE * KERNEL_SIZE
        bound = 1.0 / (fan_in ** 0.5)
        w = jax.random.uniform(kw, (cout, cin, KERNEL_SIZE, KERNEL_SIZE),
                               jnp.float32, -bound, bound)
        b = jax.random.uniform(kb, (cout,), jnp.float32, -bound, bound)
        gamma = jax.random.uniform(kg, (cout,), jnp.float32, 0.5, 1.5)
        beta = 0.1 * jax.random.normal(kbe, (cout,), jnp.float32)
        mean = 0.1 * jax.random.normal(km, (cout,), jnp.float32)
        var = jax.random.uniform(kv, (cout,), jnp.float32, 0.5, 1.5)
        params.append((w, b, gamma, beta, mean, var))
    return params


def svhn_feature_extractor(x_nchw, params):
    # TODO(synk): nn.Dropout(0.5) is stochastic in training mode; implemented here as
    # eval-mode identity (standard inference semantics).
    x = jnp.transpose(x_nchw, (0, 2, 3, 1))   # NCHW -> NHWC
    for (w, b, gamma, beta, mean, var) in params:
        x = conv_block(x, w, b, gamma, beta, mean, var)
    # Flatten in PyTorch's NCHW (C, H, W) order to match x.view(x.size(0), -1).
    x = jnp.transpose(x, (0, 3, 1, 2)).astype(jnp.float32)
    return x.reshape(x.shape[0], -1)


def ref_forward(x_nchw, params):
    # Pure-JAX reference (lax.conv + reduce_window), inference semantics.  Inputs,
    # scale-folded weights and layer outputs are rounded to bf16 (as f32) at the same
    # points where the kernel uses bf16, so the comparison stays tight.
    x = x_nchw
    for (w, b, gamma, beta, mean, var) in params:
        scale = gamma / jnp.sqrt(var + BN_EPS)
        shift = (b - mean) * scale + beta
        xb = x.astype(jnp.bfloat16).astype(jnp.float32)
        wb = (w * scale[:, None, None, None]).astype(jnp.bfloat16).astype(jnp.float32)
        y = lax.conv_general_dilated(
            xb, wb, window_strides=(1, 1),
            padding=((PADDING, PADDING), (PADDING, PADDING)),
            dimension_numbers=("NCHW", "OIHW", "NCHW"))
        y = y + shift[None, :, None, None]
        y = jnp.where(y >= 0, y, LEAKY_SLOPE * y)
        y = lax.reduce_window(y, -jnp.inf, lax.max,
                              (1, 1, 2, 2), (1, 1, 2, 2), "VALID")
        x = y.astype(jnp.bfloat16).astype(jnp.float32)
    return x.reshape(x.shape[0], -1)


if __name__ == "__main__":
    model_size = (4, 8, 16)          # small SVHN-style channel progression
    N, C, H, W = 2, model_size[0], 16, 16

    key = jax.random.PRNGKey(0)
    kx, kp = jax.random.split(key)
    x = jax.random.normal(kx, (N, C, H, W), jnp.float32)
    params = init_params(kp, model_size)

    out = svhn_feature_extractor(x, params)
    out = jax.block_until_ready(out)

    ref = jax.block_until_ready(ref_forward(x, params))
    assert out.shape == (N, model_size[-1] * (H // 4) * (W // 4)), out.shape
    assert jnp.allclose(out, ref, atol=1e-2, rtol=1e-2), float(jnp.max(jnp.abs(out - ref)))

    print("KERNEL_OK")
</pallas_src>

<mosaic_0001>
module attributes {stable_mosaic.version = 11 : i64} {
  func.func @_conv_block_kernel(%arg0: i32, %arg1: memref<1x20x80xbf16, #tpu.memory_space<vmem>>, %arg2: memref<5x80x128xbf16, #tpu.memory_space<vmem>>, %arg3: memref<1x64xf32, #tpu.memory_space<vmem>>, %arg4: memref<1x8x64xbf16, #tpu.memory_space<vmem>>) attributes {dimension_semantics = [#tpu.dimension_semantics<parallel>], iteration_bounds = array<i64: 2>, scalar_prefetch = 0 : i64, scratch_operands = 0 : i64, tpu.core_type = #tpu.core_type<tc>, window_params = [{transform_indices = @transform_0, window_bounds = array<i64: 1, 20, 80>}, {pipeline_mode = #tpu.pipeline_mode<synchronous>, transform_indices = @transform_1, window_bounds = array<i64: 5, 80, 128>}, {pipeline_mode = #tpu.pipeline_mode<synchronous>, transform_indices = @transform_2, window_bounds = array<i64: 1, 64>}, {transform_indices = @transform_3, window_bounds = array<i64: 1, 8, 64>}]} {
    %c0 = arith.constant 0 : index
    %c0_0 = arith.constant 0 : index
    %c0_1 = arith.constant 0 : index
    %0 = vector.load %arg1[%c0, %c0_0, %c0_1] : memref<1x20x80xbf16, #tpu.memory_space<vmem>>, vector<1x16x80xbf16>
    %1 = vector.shape_cast %0 : vector<1x16x80xbf16> to vector<16x80xbf16>
    %c0_2 = arith.constant 0 : index
    %c0_3 = arith.constant 0 : index
    %c0_4 = arith.constant 0 : index
    %2 = vector.load %arg2[%c0_2, %c0_3, %c0_4] : memref<5x80x128xbf16, #tpu.memory_space<vmem>>, vector<1x80x128xbf16>
    %3 = vector.shape_cast %2 : vector<1x80x128xbf16> to vector<80x128xbf16>
    %cst = arith.constant dense<0.000000e+00> : vector<16x128xf32>
    %4 = tpu.matmul %1, %3, %cst {dimension_numbers = #tpu.dot_dimension_numbers<[1], [0], [0], [1], [0, 0, 1, 1], [], []>} : vector<16x80xbf16>, vector<80x128xbf16>, vector<16x128xf32> -> vector<16x128xf32>
    %c0_5 = arith.constant 0 : index
    %c1 = arith.constant 1 : index
    %c0_6 = arith.constant 0 : index
    %5 = vector.load %arg1[%c0_5, %c1, %c0_6] : memref<1x20x80xbf16, #tpu.memory_space<vmem>>, vector<1x16x80xbf16>
    %6 = vector.shape_cast %5 : vector<1x16x80xbf16> to vector<16x80xbf16>
    %c1_7 = arith.constant 1 : index
    %c0_8 = arith.constant 0 : index
    %c0_9 = arith.constant 0 : index
    %7 = vector.load %arg2[%c1_7, %c0_8, %c0_9] : memref<5x80x128xbf16, #tpu.memory_space<vmem>>, vector<1x80x128xbf16>
    %8 = vector.shape_cast %7 : vector<1x80x128xbf16> to vector<80x128xbf16>
    %cst_10 = arith.constant dense<0.000000e+00> : vector<16x128xf32>
    %9 = tpu.matmul %6, %8, %cst_10 {dimension_numbers = #tpu.dot_dimension_numbers<[1], [0], [0], [1], [0, 0, 1, 1], [], []>} : vector<16x80xbf16>, vector<80x128xbf16>, vector<16x128xf32> -> vector<16x128xf32>
    %10 = arith.addf %4, %9 : vector<16x128xf32>
    %c0_11 = arith.constant 0 : index
    %c2 = arith.constant 2 : index
    %c0_12 = arith.constant 0 : index
    %11 = vector.load %arg1[%c0_11, %c2, %c0_12] : memref<1x20x80xbf16, #tpu.memory_space<vmem>>, vector<1x16x80xbf16>
    %12 = vector.shape_cast %11 : vector<1x16x80xbf16> to vector<16x80xbf16>
    %c2_13 = arith.constant 2 : index
    %c0_14 = arith.constant 0 : index
    %c0_15 = arith.constant 0 : index
    %13 = vector.load %arg2[%c2_13, %c0_14, %c0_15] : memref<5x80x128xbf16, #tpu.memory_space<vmem>>, vector<1x80x128xbf16>
    %14 = vector.shape_cast %13 : vector<1x80x128xbf16> to vector<80x128xbf16>
    %cst_16 = arith.constant dense<0.000000e+00> : vector<16x128xf32>
    %15 = tpu.matmul %12, %14, %cst_16 {dimension_numbers = #tpu.dot_dimension_numbers<[1], [0], [0], [1], [0, 0, 1, 1], [], []>} : vector<16x80xbf16>, vector<80x128xbf16>, vector<16x128xf32> -> vector<16x128xf32>
    %16 = arith.addf %10, %15 : vector<16x128xf32>
    %c0_17 = arith.constant 0 : index
    %c3 = arith.constant 3 : index
    %c0_18 = arith.constant 0 : index
    %17 = vector.load %arg1[%c0_17, %c3, %c0_18] : memref<1x20x80xbf16, #tpu.memory_space<vmem>>, vector<1x16x80xbf16>
    %18 = vector.shape_cast %17 : vector<1x16x80xbf16> to vector<16x80xbf16>
    %c3_19 = arith.constant 3 : index
    %c0_20 = arith.constant 0 : index
    %c0_21 = arith.constant 0 : index
    %19 = vector.load %arg2[%c3_19, %c0_20, %c0_21] : memref<5x80x128xbf16, #tpu.memory_space<vmem>>, vector<1x80x128xbf16>
    %20 = vector.shape_cast %19 : vector<1x80x128xbf16> to vector<80x128xbf16>
    %cst_22 = arith.constant dense<0.000000e+00> : vector<16x128xf32>
    %21 = tpu.matmul %18, %20, %cst_22 {dimension_numbers = #tpu.dot_dimension_numbers<[1], [0], [0], [1], [0, 0, 1, 1], [], []>} : vector<16x80xbf16>, vector<80x128xbf16>, vector<16x128xf32> -> vector<16x128xf32>
    %22 = arith.addf %16, %21 : vector<16x128xf32>
    %c0_23 = arith.constant 0 : index
    %c4 = arith.constant 4 : index
    %c0_24 = arith.constant 0 : index
    %23 = vector.load %arg1[%c0_23, %c4, %c0_24] : memref<1x20x80xbf16, #tpu.memory_space<vmem>>, vector<1x16x80xbf16>
    %24 = vector.shape_cast %23 : vector<1x16x80xbf16> to vector<16x80xbf16>
    %c4_25 = arith.constant 4 : index
    %c0_26 = arith.constant 0 : index
    %c0_27 = arith.constant 0 : index
    %25 = vector.load %arg2[%c4_25, %c0_26, %c0_27] : memref<5x80x128xbf16, #tpu.memory_space<vmem>>, vector<1x80x128xbf16>
    %26 = vector.shape_cast %25 : vector<1x80x128xbf16> to vector<80x128xbf16>
    %cst_28 = arith.constant dense<0.000000e+00> : vector<16x128xf32>
    %27 = tpu.matmul %24, %26, %cst_28 {dimension_numbers = #tpu.dot_dimension_numbers<[1], [0], [0], [1], [0, 0, 1, 1], [], []>} : vector<16x80xbf16>, vector<80x128xbf16>, vector<16x128xf32> -> vector<16x128xf32>
    %28 = arith.addf %22, %27 : vector<16x128xf32>
    %29 = vector.shape_cast %28 : vector<16x128xf32> to vector<8x2x128xf32>
    %30 = vector.extract_strided_slice %29 {offsets = [0, 0, 0], sizes = [8, 1, 128], strides = [1, 1, 1]} : vector<8x2x128xf32> to vector<8x1x128xf32>
    %31 = vector.shape_cast %30 : vector<8x1x128xf32> to vector<8x128xf32>
    %32 = vector.extract_strided_slice %29 {offsets = [0, 1, 0], sizes = [8, 1, 128], strides = [1, 1, 1]} : vector<8x2x128xf32> to vector<8x1x128xf32>
    %33 = vector.shape_cast %32 : vector<8x1x128xf32> to vector<8x128xf32>
    %34 = arith.maximumf %31, %33 : vector<8x128xf32>
    %35 = vector.extract_strided_slice %34 {offsets = [0, 0], sizes = [8, 64], strides = [1, 1]} : vector<8x128xf32> to vector<8x64xf32>
    %36 = vector.extract_strided_slice %34 {offsets = [0, 64], sizes = [8, 64], strides = [1, 1]} : vector<8x128xf32> to vector<8x64xf32>
    %37 = arith.maximumf %35, %36 : vector<8x64xf32>
    %c0_29 = arith.constant 0 : index
    %c0_30 = arith.constant 0 : index
    %38 = vector.load %arg3[%c0_29, %c0_30] : memref<1x64xf32, #tpu.memory_space<vmem>>, vector<1x64xf32>
    %39 = vector.broadcast %38 : vector<1x64xf32> to vector<8x64xf32>
    %40 = arith.addf %37, %39 : vector<8x64xf32>
    %cst_31 = arith.constant 0.000000e+00 : f32
    %41 = vector.broadcast %cst_31 : f32 to vector<8x64xf32>
    %42 = arith.cmpf oge, %40, %41 : vector<8x64xf32>
    %cst_32 = arith.constant 0.00999999977 : f32
    %43 = vector.broadcast %cst_32 : f32 to vector<8x64xf32>
    %44 = arith.mulf %43, %40 : vector<8x64xf32>
    %45 = arith.select %42, %40, %44 : vector<8x64xi1>, vector<8x64xf32>
    %46 = vector.shape_cast %45 : vector<8x64xf32> to vector<1x8x64xf32>
    %47 = arith.truncf %46 : vector<1x8x64xf32> to vector<1x8x64xbf16>
    %c0_33 = arith.constant 0 : index
    %c0_34 = arith.constant 0 : index
    %c0_35 = arith.constant 0 : index
    %48 = vector.load %arg4[%c0_33, %c0_34, %c0_35] : memref<1x8x64xbf16, #tpu.memory_space<vmem>>, vector<1x8x64xbf16>
    tpu.vector_store %arg4[%c0_33, %c0_34, %c0_35], %47 {strides = array<i32>} : memref<1x8x64xbf16, #tpu.memory_space<vmem>>, vector<1x8x64xbf16>,
    return
  }
  func.func @transform_0(%arg0: i32) -> (i32, i32, i32) {
    %c0_i32 = arith.constant 0 : i32
    %c0_i32_0 = arith.constant 0 : i32
    %c0_i32_1 = arith.constant 0 : i32
    return %arg0, %c0_i32, %c0_i32_0 : i32, i32, i32
  }
  func.func @transform_1(%arg0: i32) -> (i32, i32, i32) {
    %c0_i32 = arith.constant 0 : i32
    %c0_i32_0 = arith.constant 0 : i32
    %c0_i32_1 = arith.constant 0 : i32
    %c0_i32_2 = arith.constant 0 : i32
    return %c0_i32, %c0_i32_0, %c0_i32_1 : i32, i32, i32
  }
  func.func @transform_2(%arg0: i32) -> (i32, i32) {
    %c0_i32 = arith.constant 0 : i32
    %c0_i32_0 = arith.constant 0 : i32
    %c0_i32_1 = arith.constant 0 : i32
    return %c0_i32, %c0_i32_0 : i32, i32
  }
  func.func @transform_3(%arg0: i32) -> (i32, i32, i32) {
    %c0_i32 = arith.constant 0 : i32
    %c0_i32_0 = arith.constant 0 : i32
    %c0_i32_1 = arith.constant 0 : i32
    return %arg0, %c0_i32, %c0_i32_0 : i32, i32, i32
  }
}

</mosaic_0001>

<llo_original>
// kernel: tpu_custom_call.1
$region0: #{tpu_custom_call.1}
  #allocation0 [shape = 'u32[]', space=smem, size = 0x4, offset = 0x4, fixed_abs, tag = 'smem constant byte address 0x4 - core index']
  #allocation1 [shape = 'u32[72,128]{1,0:T(1,128)}', space=vmem, size = 0x9000, scoped, tag = 'internal scratch']
  %s0 = inlined_call_operand.vmem [shape: bf16[2,20,80], index: 0, kind: input, shape index: {}]
  %s1 = inlined_call_operand.hbm [shape: bf16[5,80,128], index: 1, kind: input, shape index: {}]
  %s2 = inlined_call_operand.vmem [shape: f32[1,64], index: 2, kind: input, shape index: {}]
  %s3 = inlined_call_operand.hbm [shape: bf16[2,8,64], index: 3, kind: output, shape index: {}]
  %s4 = sld [smem:[#allocation0]]
  $region49: #{tpu_custom_call.1} parent=0
    _
  %s6 = ssub.s32 1, %s4
  %s7 = scalar_select 0, %s6, %s4
  $region1: #{tpu_custom_call.1} parent=0
    #allocation2 [shape = 'u8[102400]{0}', space=vmem, size = 0x19000, scoped, tag = 'input window, operand 1, single buffered']
    #allocation3 [shape = 's32[2]{0}', space=sflag, size = 0x8, scoped, tag = 'scoped memory for tpu_custom_call.1']
    #allocation4 [shape = 's32[2]{0}', space=sflag, size = 0x8, scoped, tag = 'scoped memory for tpu_custom_call.1']
    #allocation5 [shape = 'u8[4096]{0}', space=vmem, size = 0x1000, scoped, tag = 'output window, operand 0']
    %8 = vsyncpa [#allocation3], 0
    %9 = vsyncpa [#allocation4], 0
    %s10 = scalar_lea.sflag [#allocation4], 1
    %11 = vsyncpa %s10, 0
    loop: start=0, step=1, limit=4
    $region2: #{tpu_custom_call.1} parent=1 // loop_pre_header
      _
    $region3: #{tpu_custom_call.1} parent=1 // loop_header
      %s13 = sphi 0, %s17
      %p14 = scmp.ge.s32.totalorder %s13, 4
      %s23 = sphi 0, %s25
      %s26 = sphi 0, %s23
      %s27 = sphi 0, %s26
      %s43 = sphi 0, %s27
      %s47 = sphi 0, %s47
      %s49 = sphi 0, %s47
      %s50 = sphi 0, %s49
      %s64 = sphi 0, %s50
      %s68 = sphi 0, %s68
      %s70 = sphi 0, %s68
      %s71 = sphi 0, %s70
      %s85 = sphi 0, %s71
      %s91 = sphi 0, %s93
      %s94 = sphi 0, %s91
      %s95 = sphi 0, %s94
      %s111 = sphi 0, %s95
    $region4: #{tpu_custom_call.1} parent=1 // loop_header_branch
      %16 = sbr.rel (%p14) target = $region8
    $region5: #{tpu_custom_call.1} parent=1 // loop_body
      %s18 = ssub.s32 %s13, 1
      %s19 = ssub.s32 %s13, 2
      %s20 = sadd.s32 %s13, 1
      %s21 = ssub.s32 %s13, %s20
      %p22 = scmp.eq.s32.totalorder %s21, 0
      %s24 = sadd.s32 %s23, 1
      %s25 = scalar_select %p22, %s23, %s24
      %p28 = pneg %p22
      %p29 = scmp.eq.s32.totalorder %s13, 1
      %p30 = por %p28, %p29
      %p31 = scmp.ne.s32.totalorder %s23, %s26
      %p32 = scmp.eq.s32.totalorder %s13, 0
      %p33 = por %p31, %p32
      %p34 = scmp.ne.s32.totalorder %s23, %s26
      %p35 = scmp.eq.s32.totalorder %s18, 1
      %p36 = por %p34, %p35
      %p37 = scmp.ne.s32.totalorder %s26, %s27
      %p38 = scmp.eq.s32.totalorder %s18, 0
      %p39 = por %p37, %p38
      %p40 = scmp.ne.s32.totalorder %s26, %s27
      %p41 = scmp.eq.s32.totalorder %s19, 1
      %p42 = por %p40, %p41
      %p44 = scmp.ne.s32.totalorder %s27, %s43
      %p45 = scmp.eq.s32.totalorder %s19, 0
      %p46 = por %p44, %p45
      %s48 = sadd.s32 %s47, 1
      %p51 = scmp.eq.s32.totalorder %s13, 1
      %p52 = scmp.ne.s32.totalorder %s47, %s49
      %p53 = scmp.eq.s32.totalorder %s13, 0
      %p54 = por %p52, %p53
      %p55 = scmp.ne.s32.totalorder %s47, %s49
      %p56 = scmp.eq.s32.totalorder %s18, 1
      %p57 = por %p55, %p56
      %p58 = scmp.ne.s32.totalorder %s49, %s50
      %p59 = scmp.eq.s32.totalorder %s18, 0
      %p60 = por %p58, %p59
      %p61 = scmp.ne.s32.totalorder %s49, %s50
      %p62 = scmp.eq.s32.totalorder %s19, 1
      %p63 = por %p61, %p62
      %p65 = scmp.ne.s32.totalorder %s50, %s64
      %p66 = scmp.eq.s32.totalorder %s19, 0
      %p67 = por %p65, %p66
      %s69 = sadd.s32 %s68, 1
      %p72 = scmp.eq.s32.totalorder %s13, 1
      %p73 = scmp.ne.s32.totalorder %s68, %s70
      %p74 = scmp.eq.s32.totalorder %s13, 0
      %p75 = por %p73, %p74
      %p76 = scmp.ne.s32.totalorder %s68, %s70
      %p77 = scmp.eq.s32.totalorder %s18, 1
      %p78 = por %p76, %p77
      %p79 = scmp.ne.s32.totalorder %s70, %s71
      %p80 = scmp.eq.s32.totalorder %s18, 0
      %p81 = por %p79, %p80
      %p82 = scmp.ne.s32.totalorder %s70, %s71
      %p83 = scmp.eq.s32.totalorder %s19, 1
      %p84 = por %p82, %p83
      %p86 = scmp.ne.s32.totalorder %s71, %s85
      %p87 = scmp.eq.s32.totalorder %s19, 0
      %p88 = por %p86, %p87
      %s89 = ssub.s32 %s13, %s20
      %p90 = scmp.eq.s32.totalorder %s89, 0
      %s92 = sadd.s32 %s91, 1
      %s93 = scalar_select %p90, %s91, %s92
      %p96 = pneg %p90
      %p97 = scmp.eq.s32.totalorder %s13, 1
      %p98 = por %p96, %p97
      %p99 = scmp.ne.s32.totalorder %s91, %s94
      %p100 = scmp.eq.s32.totalorder %s13, 0
      %p101 = por %p99, %p100
      %p102 = scmp.ne.s32.totalorder %s91, %s94
      %p103 = scmp.eq.s32.totalorder %s18, 1
      %p104 = por %p102, %p103
      %p105 = scmp.ne.s32.totalorder %s94, %s95
      %p106 = scmp.eq.s32.totalorder %s18, 0
      %p107 = por %p105, %p106
      %p108 = scmp.ne.s32.totalorder %s94, %s95
      %p109 = scmp.eq.s32.totalorder %s19, 1
      %p110 = por %p108, %p109
      %p112 = scmp.ne.s32.totalorder %s95, %s111
      %p113 = scmp.eq.s32.totalorder %s19, 0
      %p114 = por %p112, %p113
      %p115 = scmp.le.s32.totalorder 1, %s13
      %p116 = scmp.lt.s32.totalorder %s13, 3
      %p117 = pnand %p115, %p116
      %p118 = pneg %p117
      // Predicated region
      $region9: #{tpu_custom_call.1} parent=5 // pred_check
        _
      $region10: #{tpu_custom_call.1} parent=5 // pred_check_branch
        %120 = sbr.rel (%p117) target = $region12
      $region11: #{tpu_custom_call.1} parent=5 // pred_region
        %s121 = ssub.s32 %s13, 1
        // Predicated region
        $region13: #{tpu_custom_call.1} parent=11 // pred_check
          %p122 = pneg %p60
        $region14: #{tpu_custom_call.1} parent=11 // pred_check_branch
          %124 = sbr.rel (%p122) target = $region16
        $region15: #{tpu_custom_call.1} parent=11 // pred_region
          %126 = vsyncadd [#allocation3], 0
          %s127 = sshll.u32 %s1, 4
          %s128 = int_to_ptr.hbm [resolvable:$true] %s127
          %s129 = sshll.u32 [#allocation2], 4
          %s130 = int_to_ptr.vmem [resolvable:$true] %s129
          %135 = dma.hbm_to_vmem [thread:$0]  %s128, 3200, %s130, [#allocation3], 64, 64, 4
        $region16: #{tpu_custom_call.1} parent=11 // pred_fallthru
          _
        // Predicated region
        $region17: #{tpu_custom_call.1} parent=11 // pred_check
          %p136 = pneg %p81
        $region18: #{tpu_custom_call.1} parent=11 // pred_check_branch
          %138 = sbr.rel (%p136) target = $region20
        $region19: #{tpu_custom_call.1} parent=11 // pred_region
          _
        $region20: #{tpu_custom_call.1} parent=11 // pred_fallthru
          _
      $region12: #{tpu_custom_call.1} parent=5 // pred_fallthru
        _
      %p139 = scmp.lt.s32.totalorder %s13, 2
      // Predicated region
      $region21: #{tpu_custom_call.1} parent=5 // pred_check
        %p140 = pneg %p139
      $region22: #{tpu_custom_call.1} parent=5 // pred_check_branch
        %142 = sbr.rel (%p140) target = $region24
      $region23: #{tpu_custom_call.1} parent=5 // pred_region
        // Predicated region
        $region25: #{tpu_custom_call.1} parent=23 // pred_check
          %p143 = pneg %p33
        $region26: #{tpu_custom_call.1} parent=23 // pred_check_branch
          %145 = sbr.rel (%p143) target = $region28
        $region27: #{tpu_custom_call.1} parent=23 // pred_region
          %p146 = scmp.lt.s32.totalorder %s13, 1
          %s147 = scalar_select %p146, %s13, 1
          %s148 = smul.addr %s147, 3
          %s149 = smul.addr %s148, 4
          %s150 = scalar_lea.vmem %s0, %s149
        $region28: #{tpu_custom_call.1} parent=23 // pred_fallthru
          _
      $region24: #{tpu_custom_call.1} parent=5 // pred_fallthru
        _
      %p151 = scmp.le.s32.totalorder 1, %s13
      %p152 = scmp.lt.s32.totalorder %s13, 3
      %p153 = pnand %p151, %p152
      %p154 = pneg %p153
      // Predicated region
      $region29: #{tpu_custom_call.1} parent=5 // pred_check
        _
      $region30: #{tpu_custom_call.1} parent=5 // pred_check_branch
        %156 = sbr.rel (%p153) target = $region32
      $region31: #{tpu_custom_call.1} parent=5 // pred_region
        %s157 = ssub.s32 %s13, 1
        // Predicated region
        $region33: #{tpu_custom_call.1} parent=31 // pred_check
          %p158 = pneg %p60
        $region34: #{tpu_custom_call.1} parent=31 // pred_check_branch
          %160 = sbr.rel (%p158) target = $region36
        $region35: #{tpu_custom_call.1} parent=31 // pred_region
          %162 = dma.done [#allocation3], 3200
        $region36: #{tpu_custom_call.1} parent=31 // pred_fallthru
          _
        %p163 = scmp.lt.s32.totalorder %s18, 1
        %s164 = scalar_select %p163, %s18, 1
        %s165 = smul.addr %s164, 3
        %s166 = smul.addr %s165, 4
        %s167 = scalar_lea.vmem %s0, %s166
        %p168 = pneg %p39
        %p169 = pneg %p36
        %p170 = pneg %p60
        %p171 = pneg %p57
        %p172 = pneg %p81
        %p173 = pneg %p78
        %p174 = pneg %p107
        %p175 = pneg %p104
        %s176 = sand.u32 %s94, 1
        %s177 = scalar_lea.sflag [#allocation4], %s176
        %s178 = sand.u32 %s94, 1
        %s179 = smul.addr %s178, 4
        %s180 = scalar_lea.vmem [#allocation5], %s179
        %p181 = scmp.lt.s32.totalorder %s18, 1
        %s182 = scalar_select %p181, %s18, 1
        %s183 = smul.addr %s182, 3
        %s184 = smul.addr %s183, 4
        %s185 = scalar_lea.vmem %s0, %s184
        %v187 = vld [vmem:[%s185] sm:$0xf]
        %v188 = vld [vmem:[%s185 + $0x4] sm:$0xf]
        %v189 = vld [vmem:[#allocation2] sm:$0xf]
        %v190 = vld [vmem:[#allocation2 + $0x4] sm:$0xf]
        %v191 = vld [vmem:[#allocation2 + $0x8] sm:$0xf]
        %v192 = vld [vmem:[#allocation2 + $0xc] sm:$0xf]
        %v193 = vld [vmem:[#allocation2 + $0x10] sm:$0xf]
        %v194 = vld [vmem:[#allocation2 + $0x14] sm:$0xf]
        %v195 = vld [vmem:[#allocation2 + $0x18] sm:$0xf]
        %v196 = vld [vmem:[#allocation2 + $0x1c] sm:$0xf]
        %v197 = vld [vmem:[#allocation2 + $0x20] sm:$0xf]
        %v198 = vld [vmem:[#allocation2 + $0x24] sm:$0xf]
        %v199 = vld [vmem:[%s185 + $0x8] sm:$0x1]
        %s200 = scalar_lea.vmem [#allocation2], 40
        %v201 = vld [vmem:[%s200] sm:$0xf]
        %v202 = vld [vmem:[%s200 + $0x4] sm:$0xf]
        %v203 = vld [vmem:[%s200 + $0x8] sm:$0xf]
        %v204 = vld [vmem:[%s200 + $0xc] sm:$0xf]
        %v205 = vld [vmem:[%s200 + $0x10] sm:$0xf]
        %v206 = vld [vmem:[%s200 + $0x14] sm:$0xf]
        %v207 = vld [vmem:[%s200 + $0x18] sm:$0xf]
        %v208 = vld [vmem:[%s200 + $0x1c] sm:$0xf]
        %v209 = vld [vmem:[%s200 + $0x20] sm:$0xf]
        %v210 = vld [vmem:[%s200 + $0x24] sm:$0xf]
        %v214 = vunpack.c.l.b16 %v187
        %v215 = vunpack.c.l.b16 %v188
        %v216 = vunpack.c.l.b16 %v199
        %v217 = vpack.c.b16 %v215, %v214
        %v218 = vpack.c.b16 %v216, %v216
        %vm219 = vsmask.f32 7424
        %v221 = vshrl.u32 %v217, 16
        %v223 = vshll.u32 %v217, 16
        %v225 = vrot.slane %v223, 1
        %v226 = vor.u32 %v221, %v225
        %v228 = vshll.u32 %v218, 16
        %v230 = vrot.slane %v228, 1
        %v231 = vsel %vm219, %v226, %v230
        %v242 = vunpack.c.l.b16 %v201
        %v243 = vunpack.c.l.b16 %v202
        %v244 = vunpack.c.l.b16 %v203
        %v245 = vunpack.c.l.b16 %v204
        %v246 = vunpack.c.l.b16 %v205
        %v247 = vunpack.c.l.b16 %v206
        %v248 = vunpack.c.l.b16 %v207
        %v249 = vunpack.c.l.b16 %v208
        %v250 = vunpack.c.l.b16 %v209
        %v251 = vunpack.c.l.b16 %v210
        %v252 = vpack.c.b16 %v243, %v242
        %v253 = vpack.c.b16 %v245, %v244
        %v254 = vpack.c.b16 %v247, %v246
        %v255 = vpack.c.b16 %v249, %v248
        %v256 = vpack.c.b16 %v251, %v250
        %vm262 = vcmask 654336
        %v264 = vsel %vm262, %v231, 0
        %266 = vmatpush.bf16.msra.mxu0 0
        %267 = vmatpush.bf16.msra.mxu0 0
        %268 = vmatpush.bf16.msra.mxu0 0
        %269 = vmatpush.bf16.msra.mxu0 %v256
        %270 = vmatpush.bf16.msra.mxu0 %v255
        %271 = vmatpush.bf16.msra.mxu0 %v254
        %272 = vmatpush.bf16.msra.mxu0 %v253
        %273 = vmatpush.bf16.msra.mxu0 %v252
        %274 = vmatmul.bf16.gmra.mxu0 %v264
        %v275 = vpop.f32.mrf.mxu0
        %v276 = vadd.f32 0.0, %v275
        %v277 = vpop.f32.mrf.mxu0
        %v278 = vadd.f32 0.0, %v277
        %279 = vdwg.mxu0
        %v290 = vunpack.c.l.b16 %v189
        %v291 = vunpack.c.l.b16 %v190
        %v292 = vunpack.c.l.b16 %v191
        %v293 = vunpack.c.l.b16 %v192
        %v294 = vunpack.c.l.b16 %v193
        %v295 = vunpack.c.l.b16 %v194
        %v296 = vunpack.c.l.b16 %v195
        %v297 = vunpack.c.l.b16 %v196
        %v298 = vunpack.c.l.b16 %v197
        %v299 = vunpack.c.l.b16 %v198
        %v300 = vpack.c.b16 %v291, %v290
        %v301 = vpack.c.b16 %v293, %v292
        %v302 = vpack.c.b16 %v295, %v294
        %v303 = vpack.c.b16 %v297, %v296
        %v304 = vpack.c.b16 %v299, %v298
        %v310 = vsel %vm262, %v217, 0
        %312 = vmatpush.bf16.msra.mxu0 0
        %313 = vmatpush.bf16.msra.mxu0 0
        %314 = vmatpush.bf16.msra.mxu0 0
        %315 = vmatpush.bf16.msra.mxu0 %v304
        %316 = vmatpush.bf16.msra.mxu0 %v303
        %317 = vmatpush.bf16.msra.mxu0 %v302
        %318 = vmatpush.bf16.msra.mxu0 %v301
        %319 = vmatpush.bf16.msra.mxu0 %v300
        %320 = vmatmul.bf16.gmra.mxu0 %v310
        %v321 = vpop.f32.mrf.mxu0
        %v322 = vadd.f32 %v276, %v321
        %v323 = vpop.f32.mrf.mxu0
        %v324 = vadd.f32 %v278, %v323
        %325 = vdwg.mxu0
        %v326 = vld [vmem:[%s185] sm:$0xe]
        %s327 = scalar_lea.vmem [#allocation2], 80
        %v328 = vld [vmem:[%s327] sm:$0xf]
        %v329 = vld [vmem:[%s327 + $0x4] sm:$0xf]
        %v330 = vld [vmem:[%s327 + $0x8] sm:$0xf]
        %v331 = vld [vmem:[%s327 + $0xc] sm:$0xf]
        %v332 = vld [vmem:[%s327 + $0x10] sm:$0xf]
        %v333 = vld [vmem:[%s327 + $0x14] sm:$0xf]
        %v334 = vld [vmem:[%s327 + $0x18] sm:$0xf]
        %v335 = vld [vmem:[%s327 + $0x1c] sm:$0xf]
        %v336 = vld [vmem:[%s327 + $0x20] sm:$0xf]
        %v337 = vld [vmem:[%s327 + $0x24] sm:$0xf]
        %v339 = vunpack.c.l.b16 %v326
        %v340 = vpack.c.b16 %v215, %v339
        %vm341 = vcmask 1046528
        %v342 = vrot.slane %v340, 1
        %v343 = vrot.slane %v218, 1
        %v344 = vsel %vm341, %v342, %v343
        %v355 = vunpack.c.l.b16 %v328
        %v356 = vunpack.c.l.b16 %v329
        %v357 = vunpack.c.l.b16 %v330
        %v358 = vunpack.c.l.b16 %v331
        %v359 = vunpack.c.l.b16 %v332
        %v360 = vunpack.c.l.b16 %v333
        %v361 = vunpack.c.l.b16 %v334
        %v362 = vunpack.c.l.b16 %v335
        %v363 = vunpack.c.l.b16 %v336
        %v364 = vunpack.c.l.b16 %v337
        %v365 = vpack.c.b16 %v356, %v355
        %v366 = vpack.c.b16 %v358, %v357
        %v367 = vpack.c.b16 %v360, %v359
        %v368 = vpack.c.b16 %v362, %v361
        %v369 = vpack.c.b16 %v364, %v363
        %v376 = vsel %vm262, %v344, 0
        %378 = vmatpush.bf16.msra.mxu0 0
        %379 = vmatpush.bf16.msra.mxu0 0
        %380 = vmatpush.bf16.msra.mxu0 0
        %381 = vmatpush.bf16.msra.mxu0 %v369
        %382 = vmatpush.bf16.msra.mxu0 %v368
        %383 = vmatpush.bf16.msra.mxu0 %v367
        %384 = vmatpush.bf16.msra.mxu0 %v366
        %385 = vmatpush.bf16.msra.mxu0 %v365
        %386 = vmatmul.bf16.gmra.mxu0 %v376
        %v387 = vpop.f32.mrf.mxu0
        %v388 = vadd.f32 0.0, %v387
        %v389 = vpop.f32.mrf.mxu0
        %v390 = vadd.f32 0.0, %v389
        %391 = vdwg.mxu0
        %v392 = vadd.f32 %v322, %v388
        %v393 = vadd.f32 %v324, %v390
        %v394 = vld [vmem:[%s185 + $0x8] sm:$0x3]
        %s395 = scalar_lea.vmem [#allocation2], 120
        %v396 = vld [vmem:[%s395] sm:$0xf]
        %v397 = vld [vmem:[%s395 + $0x4] sm:$0xf]
        %v398 = vld [vmem:[%s395 + $0x8] sm:$0xf]
        %v399 = vld [vmem:[%s395 + $0xc] sm:$0xf]
        %v400 = vld [vmem:[%s395 + $0x10] sm:$0xf]
        %v401 = vld [vmem:[%s395 + $0x14] sm:$0xf]
        %v402 = vld [vmem:[%s395 + $0x18] sm:$0xf]
        %v403 = vld [vmem:[%s395 + $0x1c] sm:$0xf]
        %v404 = vld [vmem:[%s395 + $0x20] sm:$0xf]
        %v405 = vld [vmem:[%s395 + $0x24] sm:$0xf]
        %v407 = vunpack.c.l.b16 %v394
        %v408 = vpack.c.b16 %v407, %v407
        %vm409 = vsmask.f32 6400
        %v411 = vshrl.u32 %v340, 16
        %v413 = vrot.slane %v411, 1
        %v414 = vshll.u32 %v340, 16
        %v416 = vrot.slane %v414, 2
        %v417 = vor.u32 %v413, %v416
        %v419 = vshrl.u32 %v408, 16
        %v421 = vrot.slane %v419, 1
        %v422 = vshll.u32 %v408, 16
        %v424 = vrot.slane %v422, 2
        %v425 = vor.u32 %v421, %v424
        %v426 = vsel %vm409, %v417, %v425
        %v437 = vunpack.c.l.b16 %v396
        %v438 = vunpack.c.l.b16 %v397
        %v439 = vunpack.c.l.b16 %v398
        %v440 = vunpack.c.l.b16 %v399
        %v441 = vunpack.c.l.b16 %v400
        %v442 = vunpack.c.l.b16 %v401
        %v443 = vunpack.c.l.b16 %v402
        %v444 = vunpack.c.l.b16 %v403
        %v445 = vunpack.c.l.b16 %v404
        %v446 = vunpack.c.l.b16 %v405
        %v447 = vpack.c.b16 %v438, %v437
        %v448 = vpack.c.b16 %v440, %v439
        %v449 = vpack.c.b16 %v442, %v441
        %v450 = vpack.c.b16 %v444, %v443
        %v451 = vpack.c.b16 %v446, %v445
        %v458 = vsel %vm262, %v426, 0
        %460 = vmatpush.bf16.msra.mxu0 0
        %461 = vmatpush.bf16.msra.mxu0 0
        %462 = vmatpush.bf16.msra.mxu0 0
        %463 = vmatpush.bf16.msra.mxu0 %v451
        %464 = vmatpush.bf16.msra.mxu0 %v450
        %465 = vmatpush.bf16.msra.mxu0 %v449
        %466 = vmatpush.bf16.msra.mxu0 %v448
        %467 = vmatpush.bf16.msra.mxu0 %v447
        %468 = vmatmul.bf16.gmra.mxu0 %v458
        %v469 = vpop.f32.mrf.mxu0
        %v470 = vadd.f32 0.0, %v469
        %v471 = vpop.f32.mrf.mxu0
        %v472 = vadd.f32 0.0, %v471
        %473 = vdwg.mxu0
        %v474 = vadd.f32 %v392, %v470
        %v475 = vadd.f32 %v393, %v472
        %v476 = vld [vmem:[%s185] sm:$0xc]
        %s477 = scalar_lea.vmem [#allocation2], 160
        %v478 = vld [vmem:[%s477] sm:$0xf]
        %v479 = vld [vmem:[%s477 + $0x4] sm:$0xf]
        %v480 = vld [vmem:[%s477 + $0x8] sm:$0xf]
        %v481 = vld [vmem:[%s477 + $0xc] sm:$0xf]
        %v482 = vld [vmem:[%s477 + $0x10] sm:$0xf]
        %v483 = vld [vmem:[%s477 + $0x14] sm:$0xf]
        %v484 = vld [vmem:[%s477 + $0x18] sm:$0xf]
        %v485 = vld [vmem:[%s477 + $0x1c] sm:$0xf]
        %v486 = vld [vmem:[%s477 + $0x20] sm:$0xf]
        %v487 = vld [vmem:[%s477 + $0x24] sm:$0xf]
        %v489 = vunpack.c.l.b16 %v476
        %v490 = vpack.c.b16 %v215, %v489
        %vm491 = vcmask 1045504
        %v492 = vrot.slane %v490, 2
        %v493 = vrot.slane %v408, 2
        %v494 = vsel %vm491, %v492, %v493
        %v505 = vunpack.c.l.b16 %v478
        %v506 = vunpack.c.l.b16 %v479
        %v507 = vunpack.c.l.b16 %v480
        %v508 = vunpack.c.l.b16 %v481
        %v509 = vunpack.c.l.b16 %v482
        %v510 = vunpack.c.l.b16 %v483
        %v511 = vunpack.c.l.b16 %v484
        %v512 = vunpack.c.l.b16 %v485
        %v513 = vunpack.c.l.b16 %v486
        %v514 = vunpack.c.l.b16 %v487
        %v515 = vpack.c.b16 %v506, %v505
        %v516 = vpack.c.b16 %v508, %v507
        %v517 = vpack.c.b16 %v510, %v509
        %v518 = vpack.c.b16 %v512, %v511
        %v519 = vpack.c.b16 %v514, %v513
        %v526 = vsel %vm262, %v494, 0
        %528 = vmatpush.bf16.msra.mxu0 0
        %529 = vmatpush.bf16.msra.mxu0 0
        %530 = vmatpush.bf16.msra.mxu0 0
        %531 = vmatpush.bf16.msra.mxu0 %v519
        %532 = vmatpush.bf16.msra.mxu0 %v518
        %533 = vmatpush.bf16.msra.mxu0 %v517
        %534 = vmatpush.bf16.msra.mxu0 %v516
        %535 = vmatpush.bf16.msra.mxu0 %v515
        %536 = vmatmul.bf16.gmra.mxu0 %v526
        %v537 = vpop.f32.mrf.mxu0
        %v538 = vadd.f32 0.0, %v537
        %v539 = vpop.f32.mrf.mxu0
        %v540 = vadd.f32 0.0, %v539
        %541 = vdwg.mxu0
        %v542 = vadd.f32 %v474, %v538
        %v543 = vadd.f32 %v475, %v540
        %v546 = vrot.slane %v542, 2
        %v547 = vrot.slane %v542, 4
        %v548 = vrot.slane %v542, 6
        %v549 = vrot.slane %v543, 2
        %v550 = vrot.slane %v543, 4
        %v551 = vrot.slane %v543, 6
        %v558 = vrot.slane %v542, 7
        %v559 = vrot.slane %v558, 2
        %v560 = vrot.slane %v546, 7
        %v561 = vrot.slane %v560, 2
        %v562 = vrot.slane %v547, 7
        %v563 = vrot.slane %v562, 2
        %v564 = vrot.slane %v548, 7
        %v565 = vrot.slane %v564, 2
        %v566 = vrot.slane %v543, 7
        %v567 = vrot.slane %v566, 2
        %v568 = vrot.slane %v549, 7
        %v569 = vrot.slane %v568, 2
        %v570 = vrot.slane %v550, 7
        %v571 = vrot.slane %v570, 2
        %v572 = vrot.slane %v551, 7
        %v573 = vrot.slane %v572, 2
        %v582 = vmax.f32 %v542, %v559
        %v583 = vmax.f32 %v546, %v561
        %v584 = vmax.f32 %v547, %v563
        %v585 = vmax.f32 %v548, %v565
        %v586 = vmax.f32 %v543, %v567
        %v587 = vmax.f32 %v549, %v569
        %v588 = vmax.f32 %v550, %v571
        %v589 = vmax.f32 %v551, %v573
        %598 = vrot.lane.b32.xlu0 %v582, 64
        %v599 = vpop.permute.xlu0 %598
        %600 = vrot.lane.b32.xlu0 %v583, 64
        %v601 = vpop.permute.xlu0 %600
        %602 = vrot.lane.b32.xlu0 %v584, 64
        %v603 = vpop.permute.xlu0 %602
        %604 = vrot.lane.b32.xlu0 %v585, 64
        %v605 = vpop.permute.xlu0 %604
        %606 = vrot.lane.b32.xlu0 %v586, 64
        %v607 = vpop.permute.xlu0 %606
        %608 = vrot.lane.b32.xlu0 %v587, 64
        %v609 = vpop.permute.xlu0 %608
        %610 = vrot.lane.b32.xlu0 %v588, 64
        %v611 = vpop.permute.xlu0 %610
        %612 = vrot.lane.b32.xlu0 %v589, 64
        %v613 = vpop.permute.xlu0 %612
        %v622 = vmax.f32 %v582, %v599
        %v623 = vmax.f32 %v583, %v601
        %v624 = vmax.f32 %v584, %v603
        %v625 = vmax.f32 %v585, %v605
        %v626 = vmax.f32 %v586, %v607
        %v627 = vmax.f32 %v587, %v609
        %v628 = vmax.f32 %v588, %v611
        %v629 = vmax.f32 %v589, %v613
        %v630 = vld [vmem:[%s2] sm:$0x1]
        %v632 = vperm.slane %v630, 0
        %v633 = vrot.slane %v632, 2
        %v634 = vrot.slane %v632, 4
        %v635 = vrot.slane %v632, 6
        %v636 = vrot.slane %v632, 1
        %v637 = vrot.slane %v633, 1
        %v638 = vrot.slane %v634, 1
        %v639 = vrot.slane %v635, 1
        %v648 = vadd.f32 %v622, %v632
        %v649 = vadd.f32 %v623, %v636
        %v650 = vadd.f32 %v624, %v633
        %v651 = vadd.f32 %v625, %v637
        %v652 = vadd.f32 %v626, %v634
        %v653 = vadd.f32 %v627, %v638
        %v654 = vadd.f32 %v628, %v635
        %v655 = vadd.f32 %v629, %v639
        %vm656 = vcmp.ge.f32.partialorder %v648, 0.0
        %vm657 = vcmp.ge.f32.partialorder %v649, 0.0
        %vm658 = vcmp.ge.f32.partialorder %v650, 0.0
        %vm659 = vcmp.ge.f32.partialorder %v651, 0.0
        %vm660 = vcmp.ge.f32.partialorder %v652, 0.0
        %vm661 = vcmp.ge.f32.partialorder %v653, 0.0
        %vm662 = vcmp.ge.f32.partialorder %v654, 0.0
        %vm663 = vcmp.ge.f32.partialorder %v655, 0.0
        %v664 = vmul.f32 %v648, 0.01
        %v665 = vmul.f32 %v649, 0.01
        %v666 = vmul.f32 %v650, 0.01
        %v667 = vmul.f32 %v651, 0.01
        %v668 = vmul.f32 %v652, 0.01
        %v669 = vmul.f32 %v653, 0.01
        %v670 = vmul.f32 %v654, 0.01
        %v671 = vmul.f32 %v655, 0.01
        %v672 = vsel %vm656, %v648, %v664
        %v673 = vsel %vm657, %v649, %v665
        %v674 = vsel %vm658, %v650, %v666
        %v675 = vsel %vm659, %v651, %v667
        %v676 = vsel %vm660, %v652, %v668
        %v677 = vsel %vm661, %v653, %v669
        %v678 = vsel %vm662, %v654, %v670
        %v679 = vsel %vm663, %v655, %v671
        %v680 = vpack.c.bf16 %v672, %v672
        %v681 = vpack.c.bf16 %v673, %v673
        %v682 = vpack.c.bf16 %v674, %v674
        %v683 = vpack.c.bf16 %v675, %v675
        %v684 = vpack.c.bf16 %v676, %v676
        %v685 = vpack.c.bf16 %v677, %v677
        %v686 = vpack.c.bf16 %v678, %v678
        %v687 = vpack.c.bf16 %v679, %v679
        %v696 = vunpack.c.l.b16 %v680
        %v697 = vunpack.c.l.b16 %v681
        %v698 = vunpack.c.l.b16 %v682
        %v699 = vunpack.c.l.b16 %v683
        %v700 = vunpack.c.l.b16 %v684
        %v701 = vunpack.c.l.b16 %v685
        %v702 = vunpack.c.l.b16 %v686
        %v703 = vunpack.c.l.b16 %v687
        %v704 = vrot.slane %v697, 7
        %vm705 = vcmask 1041409
        %v706 = vsel %vm705, %v704, %v696
        %v707 = vrot.slane %v698, 6
        %vm708 = vcmask 1042434
        %v709 = vsel %vm708, %v707, %v706
        %v710 = vrot.slane %v699, 5
        %vm711 = vcmask 1043459
        %v712 = vsel %vm711, %v710, %v709
        %v713 = vrot.slane %v700, 4
        %vm714 = vcmask 1044484
        %v715 = vsel %vm714, %v713, %v712
        %v716 = vrot.slane %v701, 3
        %vm717 = vcmask 1045509
        %v718 = vsel %vm717, %v716, %v715
        %v719 = vrot.slane %v702, 2
        %vm720 = vcmask 1046534
        %v721 = vsel %vm720, %v719, %v718
        %v722 = vrot.slane %v703, 1
        %vm723 = vcmask 1047559
        %v724 = vsel %vm723, %v722, %v721
        %v725 = vpack.c.b16 %v724, %v724
        %vm727 = vcmask 519168
        %728 = vst.msk [vmem:[%s180] sm:$0xf] %vm727, %v725
        %s729 = sand.u32 %s94, 1
        %s730 = scalar_lea.sflag [#allocation4], %s729
        %s731 = sand.u32 %s94, 1
        %s732 = smul.addr %s731, 4
        %s733 = scalar_lea.vmem [#allocation5], %s732
        // Predicated region
        $region37: #{tpu_custom_call.1} parent=31 // pred_check
          %p734 = pneg %p104
        $region38: #{tpu_custom_call.1} parent=31 // pred_check_branch
          %736 = sbr.rel (%p734) target = $region40
        $region39: #{tpu_custom_call.1} parent=31 // pred_region
          %738 = vsyncadd %s730, 0
          %s739 = smul.addr %s18, 4
          %s740 = scalar_lea.hbm %s3, %s739
          %s742 = sshll.u32 %s733, 4
          %s743 = int_to_ptr.vmem [resolvable:$true] %s742
          %s744 = sshll.u32 %s740, 4
          %s745 = int_to_ptr.hbm [resolvable:$true] %s744
          %747 = dma.vmem_to_hbm [thread:$0]  %s743, 64, %s745, %s730
        $region40: #{tpu_custom_call.1} parent=31 // pred_fallthru
          _
      $region32: #{tpu_custom_call.1} parent=5 // pred_fallthru
        _
      %p748 = scmp.le.s32.totalorder 2, %s13
      // Predicated region
      $region41: #{tpu_custom_call.1} parent=5 // pred_check
        %p749 = pneg %p748
      $region42: #{tpu_custom_call.1} parent=5 // pred_check_branch
        %751 = sbr.rel (%p749) target = $region44
      $region43: #{tpu_custom_call.1} parent=5 // pred_region
        %s752 = ssub.s32 %s13, 2
        // Predicated region
        $region45: #{tpu_custom_call.1} parent=43 // pred_check
          %p753 = pneg %p110
        $region46: #{tpu_custom_call.1} parent=43 // pred_check_branch
          %755 = sbr.rel (%p753) target = $region48
        $region47: #{tpu_custom_call.1} parent=43 // pred_region
          %s756 = sand.u32 %s95, 1
          %s757 = scalar_lea.sflag [#allocation4], %s756
          %s758 = sand.u32 %s95, 1
          %s759 = smul.addr %s758, 4
          %s760 = scalar_lea.vmem [#allocation5], %s759
          %762 = dma.done %s757, 64
        $region48: #{tpu_custom_call.1} parent=43 // pred_fallthru
          _
      $region44: #{tpu_custom_call.1} parent=5 // pred_fallthru
        _
    $region6: #{tpu_custom_call.1} parent=1 // loop_footer
      %s17 = sadd.s32 1, %s13
    $region7: #{tpu_custom_call.1} parent=1 // loop_footer_branch
      %12 = sbr.rel target = $region3
    $region8: #{tpu_custom_call.1} parent=1 // loop_exit
      _
    %763 = vsyncpa [#allocation3], 1
    %s764 = scalar_lea.sflag [#allocation3], 1
    %765 = vsyncpa %s764, 1
    %766 = vsyncpa [#allocation4], 1
    %s767 = scalar_lea.sflag [#allocation4], 1
    %768 = vsyncpa %s767, 1

</llo_original>
